<compile_context>
chip_gen: v6e
topology: v6e:2x2x1
jax: 0.10.0
libtpu: 0.0.40
codegen_flags: <defaults>
</compile_context>

<pallas_src>
import jax
import jax.numpy as jnp
from jax.experimental import pallas as pl
from jax.experimental.pallas import tpu as pltpu


def _round_up(n, m):
    return ((n + m - 1) // m) * m


# ----------------------------- Pallas kernel --------------------------------
def _q_mlp_kernel(xT_ref, w1T_ref, b1_ref, w2T_ref, b2_ref, w3_ref, b3_ref, o_ref):
    # Transposed layout: batch on the lane axis.
    #   xT:  [D_pad, TB]  bf16      w1T: [H1, D_pad] bf16   b1: [H1, 1] f32
    #   w2T: [H2, H1]     bf16      b2:  [H2, 1]     f32
    #   w3:  [H2, 1]      f32       b3:  [1, 1]      f32    out: [1, TB] f32
    xT = xT_ref[...]

    # Layer 1: MXU matmul (bf16 operands, f32 accumulate), f32 bias + ReLU.
    h1 = jnp.dot(w1T_ref[...], xT, preferred_element_type=jnp.float32)      # [H1, TB]
    h1 = jnp.maximum(h1 + b1_ref[...], 0.0)

    # Layer 2: MXU matmul, f32 epilogue.
    h2 = jnp.dot(w2T_ref[...], h1.astype(jnp.bfloat16),
                 preferred_element_type=jnp.float32)                        # [H2, TB]
    h2 = jnp.maximum(h2 + b2_ref[...], 0.0)

    # Layer 3 (fan_out = 1): VPU multiply + sublane reduction instead of an
    # N=1 MXU pass; result is already lane-dense [1, TB].
    q = jnp.sum(h2 * w3_ref[...], axis=0, keepdims=True) + b3_ref[...]       # [1, TB]
    o_ref[...] = q


def q_mlp_pallas(x, params, *, block_b=1024):
    """3-layer Q MLP as a batch-tiled, lane-dense Pallas kernel.

    x: [B, D_in] f32.  params: (w1 [D,H1], b1 [1,H1], w2 [H1,H2], b2 [1,H2],
    w3 [H2,1], b3 [1,1]).  Returns q: [B] f32.
    """
    w1, b1, w2, b2, w3, b3 = params
    B, D = x.shape
    H1 = w1.shape[1]
    H2 = w2.shape[1]

    D_pad = _round_up(D, 128)                       # full lane width for the K dim
    TB = min(block_b, _round_up(max(B, 1), 128))    # batch tile (lane axis)
    B_pad = _round_up(B, TB)

    # Transposed / zero-padded / bf16 operands (batch -> lanes).  Zero-padding
    # the K rows of w1 keeps the math exact.
    xT = jnp.zeros((D_pad, B_pad), jnp.bfloat16).at[:D, :B].set(
        x.T.astype(jnp.bfloat16))
    w1T = jnp.zeros((H1, D_pad), jnp.bfloat16).at[:, :D].set(
        w1.T.astype(jnp.bfloat16))
    w2T = w2.T.astype(jnp.bfloat16)                 # [H2, H1]
    b1c = b1.T.astype(jnp.float32)                  # [H1, 1]
    b2c = b2.T.astype(jnp.float32)                  # [H2, 1]
    w3c = w3.astype(jnp.float32)                    # [H2, 1]
    b3c = b3.astype(jnp.float32).reshape(1, 1)      # [1, 1]

    grid = (B_pad // TB,)

    # Weights/biases: full-array block, constant index_map -> loaded once,
    # VMEM-resident across all grid steps.
    const = lambda a: pl.BlockSpec(a.shape, lambda i: (0, 0),
                                   memory_space=pltpu.VMEM)

    qT = pl.pallas_call(
        _q_mlp_kernel,
        out_shape=jax.ShapeDtypeStruct((1, B_pad), jnp.float32),
        grid=grid,
        in_specs=[
            pl.BlockSpec((D_pad, TB), lambda i: (0, i), memory_space=pltpu.VMEM),
            const(w1T), const(b1c), const(w2T), const(b2c), const(w3c), const(b3c),
        ],
        out_specs=pl.BlockSpec((1, TB), lambda i: (0, i), memory_space=pltpu.VMEM),
        compiler_params=pltpu.CompilerParams(dimension_semantics=("parallel",)),
    )(xT, w1T, b1c, w2T, b2c, w3c, b3c)

    return qT[0, :B]                                # [B]


# ------------------------------ glue (JAX) ----------------------------------
def build_obs_history(obs_history, history_indexes, extra_obs=None):
    """Mirror of the PyTorch build_obs_history (negative indexes from the end)."""
    T = obs_history.shape[1]
    if extra_obs is not None:
        parts = [obs_history[:, T + idx + 1, :] for idx in history_indexes[1:]]
        parts.append(extra_obs)
    else:
        parts = [obs_history[:, T + idx, :] for idx in history_indexes]
    return jnp.concatenate(parts, axis=-1)


def mlp_q_forward(obs_history, act, params, history_indexes, extra_obs=None):
    final_observation = build_obs_history(obs_history, history_indexes, extra_obs)
    x = jnp.concatenate([final_observation, act], axis=-1).astype(jnp.float32)
    q = q_mlp_pallas(x, params)           # [B]
    return q                              # matches torch.squeeze(q, -1)


# -------------------------- parameter construction --------------------------
def init_linear(key, fan_in, fan_out):
    """Matches torch.nn.Linear's U(-1/sqrt(fan_in), 1/sqrt(fan_in)) init."""
    kw, kb = jax.random.split(key)
    bound = 1.0 / jnp.sqrt(jnp.float32(fan_in))
    w = jax.random.uniform(kw, (fan_in, fan_out), jnp.float32, -bound, bound)
    b = jax.random.uniform(kb, (1, fan_out), jnp.float32, -bound, bound)
    return w, b


def init_q_params(key, in_dim, hidden_sizes):
    sizes = [in_dim] + list(hidden_sizes) + [1]
    params = []
    for j in range(len(sizes) - 1):
        key, sub = jax.random.split(key)
        w, b = init_linear(sub, sizes[j], sizes[j + 1])
        params += [w, b]
    return tuple(params)


# ---------------------------------- main -------------------------------------
if __name__ == "__main__":
    key = jax.random.PRNGKey(0)

    B = 4                 # batch
    T = 8                 # history length (time steps stored)
    obs_dim = 8
    act_dim = 4
    hidden_sizes = (32, 32)
    history_indexes = [-3, -2, -1]

    in_dim = obs_dim * len(history_indexes) + act_dim   # 8*3 + 4 = 28

    k1, k2, k3 = jax.random.split(key, 3)
    obs_history = jax.random.normal(k1, (B, T, obs_dim), jnp.float32)
    act = jax.random.normal(k2, (B, act_dim), jnp.float32)
    params = init_q_params(k3, in_dim, hidden_sizes)

    q = mlp_q_forward(obs_history, act, params, history_indexes)
    q = jax.block_until_ready(q)

    # Sanity check vs. a JAX reference that mirrors the bf16-MXU / f32-accumulate
    # numerics of the kernel.
    x_ref = jnp.concatenate(
        [obs_history[:, T + i, :] for i in history_indexes] + [act], axis=-1)
    w1, b1, w2, b2, w3, b3 = params
    h = jnp.maximum(jnp.dot(x_ref.astype(jnp.bfloat16), w1.astype(jnp.bfloat16),
                            preferred_element_type=jnp.float32) + b1, 0.0)
    h = jnp.maximum(jnp.dot(h.astype(jnp.bfloat16), w2.astype(jnp.bfloat16),
                            preferred_element_type=jnp.float32) + b2, 0.0)
    q_ref = jnp.squeeze(h @ w3 + b3, -1)

    assert q.shape == (B,)
    assert jnp.allclose(q, q_ref, atol=2e-3, rtol=2e-3), (q, q_ref)

    print("KERNEL_OK")
</pallas_src>

<mosaic_0001>
module attributes {stable_mosaic.version = 11 : i64} {
  func.func @_q_mlp_kernel(%arg0: i32, %arg1: memref<128x128xbf16, #tpu.memory_space<vmem>>, %arg2: memref<32x128xbf16, #tpu.memory_space<vmem>>, %arg3: memref<32x1xf32, #tpu.memory_space<vmem>>, %arg4: memref<32x32xbf16, #tpu.memory_space<vmem>>, %arg5: memref<32x1xf32, #tpu.memory_space<vmem>>, %arg6: memref<32x1xf32, #tpu.memory_space<vmem>>, %arg7: memref<1x1xf32, #tpu.memory_space<vmem>>, %arg8: memref<1x128xf32, #tpu.memory_space<vmem>>) attributes {dimension_semantics = [#tpu.dimension_semantics<parallel>], iteration_bounds = array<i64: 1>, scalar_prefetch = 0 : i64, scratch_operands = 0 : i64, tpu.core_type = #tpu.core_type<tc>, window_params = [{transform_indices = @transform_0, window_bounds = array<i64: 128, 128>}, {pipeline_mode = #tpu.pipeline_mode<synchronous>, transform_indices = @transform_1, window_bounds = array<i64: 32, 128>}, {pipeline_mode = #tpu.pipeline_mode<synchronous>, transform_indices = @transform_2, window_bounds = array<i64: 32, 1>}, {pipeline_mode = #tpu.pipeline_mode<synchronous>, transform_indices = @transform_3, window_bounds = array<i64: 32, 32>}, {pipeline_mode = #tpu.pipeline_mode<synchronous>, transform_indices = @transform_4, window_bounds = array<i64: 32, 1>}, {pipeline_mode = #tpu.pipeline_mode<synchronous>, transform_indices = @transform_5, window_bounds = array<i64: 32, 1>}, {pipeline_mode = #tpu.pipeline_mode<synchronous>, transform_indices = @transform_6, window_bounds = array<i64: 1, 1>}, {transform_indices = @transform_7, window_bounds = array<i64: 1, 128>}]} {
    %c0 = arith.constant 0 : index
    %c0_0 = arith.constant 0 : index
    %0 = vector.load %arg1[%c0, %c0_0] : memref<128x128xbf16, #tpu.memory_space<vmem>>, vector<128x128xbf16>
    %c0_1 = arith.constant 0 : index
    %c0_2 = arith.constant 0 : index
    %1 = vector.load %arg2[%c0_1, %c0_2] : memref<32x128xbf16, #tpu.memory_space<vmem>>, vector<32x128xbf16>
    %cst = arith.constant dense<0.000000e+00> : vector<32x128xf32>
    %2 = tpu.matmul %1, %0, %cst {dimension_numbers = #tpu.dot_dimension_numbers<[1], [0], [0], [1], [0, 0, 1, 1], [], []>} : vector<32x128xbf16>, vector<128x128xbf16>, vector<32x128xf32> -> vector<32x128xf32>
    %c0_3 = arith.constant 0 : index
    %c0_4 = arith.constant 0 : index
    %3 = vector.load %arg3[%c0_3, %c0_4] : memref<32x1xf32, #tpu.memory_space<vmem>>, vector<32x1xf32>
    %4 = vector.broadcast %3 : vector<32x1xf32> to vector<32x128xf32>
    %5 = arith.addf %2, %4 : vector<32x128xf32>
    %cst_5 = arith.constant 0.000000e+00 : f32
    %6 = vector.broadcast %cst_5 : f32 to vector<32x128xf32>
    %7 = arith.maximumf %5, %6 : vector<32x128xf32>
    %c0_6 = arith.constant 0 : index
    %c0_7 = arith.constant 0 : index
    %8 = vector.load %arg4[%c0_6, %c0_7] : memref<32x32xbf16, #tpu.memory_space<vmem>>, vector<32x32xbf16>
    %9 = arith.truncf %7 : vector<32x128xf32> to vector<32x128xbf16>
    %cst_8 = arith.constant dense<0.000000e+00> : vector<32x128xf32>
    %10 = tpu.matmul %8, %9, %cst_8 {dimension_numbers = #tpu.dot_dimension_numbers<[1], [0], [0], [1], [0, 0, 1, 1], [], []>} : vector<32x32xbf16>, vector<32x128xbf16>, vector<32x128xf32> -> vector<32x128xf32>
    %c0_9 = arith.constant 0 : index
    %c0_10 = arith.constant 0 : index
    %11 = vector.load %arg5[%c0_9, %c0_10] : memref<32x1xf32, #tpu.memory_space<vmem>>, vector<32x1xf32>
    %12 = vector.broadcast %11 : vector<32x1xf32> to vector<32x128xf32>
    %13 = arith.addf %10, %12 : vector<32x128xf32>
    %cst_11 = arith.constant 0.000000e+00 : f32
    %14 = vector.broadcast %cst_11 : f32 to vector<32x128xf32>
    %15 = arith.maximumf %13, %14 : vector<32x128xf32>
    %c0_12 = arith.constant 0 : index
    %c0_13 = arith.constant 0 : index
    %16 = vector.load %arg6[%c0_12, %c0_13] : memref<32x1xf32, #tpu.memory_space<vmem>>, vector<32x1xf32>
    %17 = vector.broadcast %16 : vector<32x1xf32> to vector<32x128xf32>
    %18 = arith.mulf %15, %17 : vector<32x128xf32>
    %cst_14 = arith.constant dense<0.000000e+00> : vector<128xf32>
    %19 = vector.multi_reduction <add>, %18, %cst_14 [0] : vector<32x128xf32> to vector<128xf32>
    %20 = vector.shape_cast %19 : vector<128xf32> to vector<1x128xf32>
    %c0_15 = arith.constant 0 : index
    %c0_16 = arith.constant 0 : index
    %21 = vector.load %arg7[%c0_15, %c0_16] : memref<1x1xf32, #tpu.memory_space<vmem>>, vector<1x1xf32>
    %22 = vector.broadcast %21 : vector<1x1xf32> to vector<1x128xf32>
    %23 = arith.addf %20, %22 : vector<1x128xf32>
    %c0_17 = arith.constant 0 : index
    %c0_18 = arith.constant 0 : index
    %24 = vector.load %arg8[%c0_17, %c0_18] : memref<1x128xf32, #tpu.memory_space<vmem>>, vector<1x128xf32>
    tpu.vector_store %arg8[%c0_17, %c0_18], %23 {strides = array<i32>} : memref<1x128xf32, #tpu.memory_space<vmem>>, vector<1x128xf32>,
    return
  }
  func.func @transform_0(%arg0: i32) -> (i32, i32) {
    %c0_i32 = arith.constant 0 : i32
    %c0_i32_0 = arith.constant 0 : i32
    return %c0_i32, %arg0 : i32, i32
  }
  func.func @transform_1(%arg0: i32) -> (i32, i32) {
    %c0_i32 = arith.constant 0 : i32
    %c0_i32_0 = arith.constant 0 : i32
    %c0_i32_1 = arith.constant 0 : i32
    return %c0_i32, %c0_i32_0 : i32, i32
  }
  func.func @transform_2(%arg0: i32) -> (i32, i32) {
    %c0_i32 = arith.constant 0 : i32
    %c0_i32_0 = arith.constant 0 : i32
    %c0_i32_1 = arith.constant 0 : i32
    return %c0_i32, %c0_i32_0 : i32, i32
  }
  func.func @transform_3(%arg0: i32) -> (i32, i32) {
    %c0_i32 = arith.constant 0 : i32
    %c0_i32_0 = arith.constant 0 : i32
    %c0_i32_1 = arith.constant 0 : i32
    return %c0_i32, %c0_i32_0 : i32, i32
  }
  func.func @transform_4(%arg0: i32) -> (i32, i32) {
    %c0_i32 = arith.constant 0 : i32
    %c0_i32_0 = arith.constant 0 : i32
    %c0_i32_1 = arith.constant 0 : i32
    return %c0_i32, %c0_i32_0 : i32, i32
  }
  func.func @transform_5(%arg0: i32) -> (i32, i32) {
    %c0_i32 = arith.constant 0 : i32
    %c0_i32_0 = arith.constant 0 : i32
    %c0_i32_1 = arith.constant 0 : i32
    return %c0_i32, %c0_i32_0 : i32, i32
  }
  func.func @transform_6(%arg0: i32) -> (i32, i32) {
    %c0_i32 = arith.constant 0 : i32
    %c0_i32_0 = arith.constant 0 : i32
    %c0_i32_1 = arith.constant 0 : i32
    return %c0_i32, %c0_i32_0 : i32, i32
  }
  func.func @transform_7(%arg0: i32) -> (i32, i32) {
    %c0_i32 = arith.constant 0 : i32
    %c0_i32_0 = arith.constant 0 : i32
    return %c0_i32, %arg0 : i32, i32
  }
}

</mosaic_0001>

<llo_original>
// kernel: tpu_custom_call.1
$region0: #{tpu_custom_call.1}
  #allocation0 [shape = 'u32[]', space=smem, size = 0x4, offset = 0x4, fixed_abs, tag = 'smem constant byte address 0x4 - core index']
  #allocation1 [shape = 'u32[144,128]{1,0:T(1,128)}', space=vmem, size = 0x12000, scoped, tag = 'internal scratch']
  #allocation2 [shape = 'f32[1,1]{1,0:T(1,128)S(1)}', space=vmem, size = 0x200, scoped, tag = 'scoped memory for tpu_custom_call.1']
  %s0 = inlined_call_operand.vmem [shape: bf16[128,128], index: 0, kind: input, shape index: {}]
  %s1 = inlined_call_operand.vmem [shape: bf16[32,128], index: 1, kind: input, shape index: {}]
  %s2 = inlined_call_operand.vmem [shape: f32[32,1], index: 2, kind: input, shape index: {}]
  %s3 = inlined_call_operand.vmem [shape: bf16[32,32], index: 3, kind: input, shape index: {}]
  %s4 = inlined_call_operand.vmem [shape: f32[32,1], index: 4, kind: input, shape index: {}]
  %s5 = inlined_call_operand.vmem [shape: f32[32,1], index: 5, kind: input, shape index: {}]
  %s6 = inlined_call_operand.<no memory space> [shape: f32[1,1], index: 6, kind: input, shape index: {}]
  %s7 = inlined_call_operand.hbm [shape: f32[1,128], index: 7, kind: output, shape index: {}]
  %s8 = sld [smem:[#allocation0]]
  $region38: #{tpu_custom_call.1} parent=0
    _
  %s10 = ssub.s32 1, %s8
  %s11 = scalar_select 0, %s10, %s8
  %v12 = vstv %s6
  %13 = vst [vmem:[#allocation2] sm:$0x1] %v12
  $region1: #{tpu_custom_call.1} parent=0
    #allocation3 [shape = 'u8[512]{0}', space=vmem, size = 0x400, scoped, tag = 'output window, operand 0, single buffered']
    #allocation4 [shape = 's32[1]{0}', space=sflag, size = 0x4, scoped, tag = 'scoped memory for tpu_custom_call.1']
    %14 = vsyncpa [#allocation4], 0
    // Predicated region
    $region2: #{tpu_custom_call.1} parent=1 // pred_check
      _
    $region3: #{tpu_custom_call.1} parent=1 // pred_check_branch
      %16 = sbr.rel (0) target = $region5
    $region4: #{tpu_custom_call.1} parent=1 // pred_region
      _
    $region5: #{tpu_custom_call.1} parent=1 // pred_fallthru
      _
    // Predicated region
    $region6: #{tpu_custom_call.1} parent=1 // pred_check
      _
    $region7: #{tpu_custom_call.1} parent=1 // pred_check_branch
      %18 = sbr.rel (0) target = $region9
    $region8: #{tpu_custom_call.1} parent=1 // pred_region
      _
    $region9: #{tpu_custom_call.1} parent=1 // pred_fallthru
      _
    // Predicated region
    $region10: #{tpu_custom_call.1} parent=1 // pred_check
      _
    $region11: #{tpu_custom_call.1} parent=1 // pred_check_branch
      %20 = sbr.rel (0) target = $region13
    $region12: #{tpu_custom_call.1} parent=1 // pred_region
      _
    $region13: #{tpu_custom_call.1} parent=1 // pred_fallthru
      _
    // Predicated region
    $region14: #{tpu_custom_call.1} parent=1 // pred_check
      _
    $region15: #{tpu_custom_call.1} parent=1 // pred_check_branch
      %22 = sbr.rel (0) target = $region17
    $region16: #{tpu_custom_call.1} parent=1 // pred_region
      _
    $region17: #{tpu_custom_call.1} parent=1 // pred_fallthru
      _
    // Predicated region
    $region18: #{tpu_custom_call.1} parent=1 // pred_check
      _
    $region19: #{tpu_custom_call.1} parent=1 // pred_check_branch
      %24 = sbr.rel (0) target = $region21
    $region20: #{tpu_custom_call.1} parent=1 // pred_region
      _
    $region21: #{tpu_custom_call.1} parent=1 // pred_fallthru
      _
    // Predicated region
    $region22: #{tpu_custom_call.1} parent=1 // pred_check
      _
    $region23: #{tpu_custom_call.1} parent=1 // pred_check_branch
      %26 = sbr.rel (0) target = $region25
    $region24: #{tpu_custom_call.1} parent=1 // pred_region
      _
    $region25: #{tpu_custom_call.1} parent=1 // pred_fallthru
      _
    // Predicated region
    $region26: #{tpu_custom_call.1} parent=1 // pred_check
      _
    $region27: #{tpu_custom_call.1} parent=1 // pred_check_branch
      %28 = sbr.rel (0) target = $region29
    $region28: #{tpu_custom_call.1} parent=1 // pred_region
      _
    $region29: #{tpu_custom_call.1} parent=1 // pred_fallthru
      _
    %v30 = vld [vmem:[%s0] sm:$0xf]
    %v31 = vld [vmem:[%s0 + $0x4] sm:$0xf]
    %v32 = vld [vmem:[%s0 + $0x8] sm:$0xf]
    %v33 = vld [vmem:[%s0 + $0xc] sm:$0xf]
    %v34 = vld [vmem:[%s0 + $0x10] sm:$0xf]
    %v35 = vld [vmem:[%s0 + $0x14] sm:$0xf]
    %v36 = vld [vmem:[%s0 + $0x18] sm:$0xf]
    %v37 = vld [vmem:[%s0 + $0x1c] sm:$0xf]
    %v38 = vld [vmem:[%s0 + $0x20] sm:$0xf]
    %v39 = vld [vmem:[%s0 + $0x24] sm:$0xf]
    %v40 = vld [vmem:[%s0 + $0x28] sm:$0xf]
    %v41 = vld [vmem:[%s0 + $0x2c] sm:$0xf]
    %v42 = vld [vmem:[%s0 + $0x30] sm:$0xf]
    %v43 = vld [vmem:[%s0 + $0x34] sm:$0xf]
    %v44 = vld [vmem:[%s0 + $0x38] sm:$0xf]
    %v45 = vld [vmem:[%s0 + $0x3c] sm:$0xf]
    %v46 = vld [vmem:[%s1] sm:$0xf]
    %v47 = vld [vmem:[%s1 + $0x4] sm:$0xf]
    %v48 = vld [vmem:[%s1 + $0x8] sm:$0xf]
    %v49 = vld [vmem:[%s1 + $0xc] sm:$0xf]
    %v50 = vld [vmem:[%s2] sm:$0xff]
    %v51 = vld [vmem:[%s2 + $0x8] sm:$0xff]
    %v52 = vld [vmem:[%s2 + $0x10] sm:$0xff]
    %v53 = vld [vmem:[%s2 + $0x18] sm:$0xff]
    %55 = vset.pattern.permute.xlu0 0
    %56 = vperm.xlu0 %55, %v50
    %v57 = vpop.permute.xlu0 %56
    %60 = vset.pattern.permute.xlu0 0
    %61 = vperm.xlu0 %60, %v51
    %v62 = vpop.permute.xlu0 %61
    %65 = vset.pattern.permute.xlu0 0
    %66 = vperm.xlu0 %65, %v52
    %v67 = vpop.permute.xlu0 %66
    %70 = vset.pattern.permute.xlu0 0
    %71 = vperm.xlu0 %70, %v53
    %v72 = vpop.permute.xlu0 %71
    %v78 = vunpack.c.l.b16 %v46
    %v79 = vunpack.c.l.b16 %v47
    %v80 = vunpack.c.l.b16 %v48
    %v81 = vunpack.c.l.b16 %v49
    %v82 = vpack.c.b16 %v79, %v78
    %v83 = vpack.c.b16 %v81, %v80
    %v102 = vunpack.c.l.b16 %v30
    %v103 = vunpack.c.l.b16 %v31
    %v104 = vunpack.c.l.b16 %v32
    %v105 = vunpack.c.l.b16 %v33
    %v106 = vunpack.c.l.b16 %v34
    %v107 = vunpack.c.l.b16 %v35
    %v108 = vunpack.c.l.b16 %v36
    %v109 = vunpack.c.l.b16 %v37
    %v110 = vunpack.c.l.b16 %v38
    %v111 = vunpack.c.l.b16 %v39
    %v112 = vunpack.c.l.b16 %v40
    %v113 = vunpack.c.l.b16 %v41
    %v114 = vunpack.c.l.b16 %v42
    %v115 = vunpack.c.l.b16 %v43
    %v116 = vunpack.c.l.b16 %v44
    %v117 = vunpack.c.l.b16 %v45
    %v118 = vpack.c.b16 %v103, %v102
    %v119 = vpack.c.b16 %v105, %v104
    %v120 = vpack.c.b16 %v107, %v106
    %v121 = vpack.c.b16 %v109, %v108
    %v122 = vpack.c.b16 %v111, %v110
    %v123 = vpack.c.b16 %v113, %v112
    %v124 = vpack.c.b16 %v115, %v114
    %v125 = vpack.c.b16 %v117, %v116
    %134 = vmatprep.subr.bf16.mxu0 0
    %135 = vmatpush1.bf16.msra.mxu0 %v125
    %136 = vmatprep.subr.bf16.mxu0 0
    %137 = vmatpush1.bf16.msra.mxu0 %v124
    %138 = vmatprep.subr.bf16.mxu0 0
    %139 = vmatpush1.bf16.msra.mxu0 %v123
    %140 = vmatprep.subr.bf16.mxu0 0
    %141 = vmatpush1.bf16.msra.mxu0 %v122
    %142 = vmatprep.subr.bf16.mxu0 0
    %143 = vmatpush1.bf16.msra.mxu0 %v121
    %144 = vmatprep.subr.bf16.mxu0 0
    %145 = vmatpush1.bf16.msra.mxu0 %v120
    %146 = vmatprep.subr.bf16.mxu0 0
    %147 = vmatpush1.bf16.msra.mxu0 %v119
    %148 = vmatprep.subr.bf16.mxu0 0
    %149 = vmatpush1.bf16.msra.mxu0 %v118
    %150 = vmatprep.subr.bf16.mxu0 0
    %151 = vmatpush2.bf16.msra.mxu0 0
    %152 = vmatprep.subr.bf16.mxu0 0
    %153 = vmatpush2.bf16.msra.mxu0 0
    %154 = vmatprep.subr.bf16.mxu0 0
    %155 = vmatpush2.bf16.msra.mxu0 0
    %156 = vmatprep.subr.bf16.mxu0 0
    %157 = vmatpush2.bf16.msra.mxu0 0
    %158 = vmatprep.subr.bf16.mxu0 0
    %159 = vmatpush2.bf16.msra.mxu0 0
    %160 = vmatprep.subr.bf16.mxu0 0
    %161 = vmatpush2.bf16.msra.mxu0 0
    %162 = vmatprep.subr.bf16.mxu0 0
    %163 = vmatpush2.bf16.msra.mxu0 0
    %164 = vmatprep.subr.bf16.mxu0 0
    %165 = vmatpush2.bf16.msra.mxu0 0
    %166 = vmatprep.mubr.bf16.mxu0 0
    %167 = vmatmul.mubr.bf16.gmra.mxu0 %v82
    %v168 = vpop.f32.mrf.mxu0
    %v169 = vadd.f32 %v57, %v168
    %v170 = vpop.f32.mrf.mxu0
    %v171 = vpop.f32.mrf.mxu0
    %v172 = vadd.f32 %v62, %v171
    %v173 = vpop.f32.mrf.mxu0
    %174 = vmatprep.mubr.bf16.mxu0 0
    %175 = vmatmul.mubr.bf16.gmra.mxu0 %v83
    %v176 = vpop.f32.mrf.mxu0
    %v177 = vadd.f32 %v67, %v176
    %v178 = vpop.f32.mrf.mxu0
    %v179 = vpop.f32.mrf.mxu0
    %v180 = vadd.f32 %v72, %v179
    %v181 = vpop.f32.mrf.mxu0
    %182 = vdwg.mxu0
    %v183 = vmax.f32 %v169, 0.0
    %v184 = vmax.f32 %v172, 0.0
    %v185 = vmax.f32 %v177, 0.0
    %v186 = vmax.f32 %v180, 0.0
    %v187 = vld [vmem:[%s3] sm:$0xf]
    %v188 = vld [vmem:[%s3 + $0x4] sm:$0xf]
    %v189 = vld [vmem:[%s3 + $0x8] sm:$0xf]
    %v190 = vld [vmem:[%s3 + $0xc] sm:$0xf]
    %v191 = vpack.c.bf16 %v184, %v183
    %v192 = vpack.c.bf16 %v186, %v185
    %v193 = vld [vmem:[%s4] sm:$0xff]
    %v194 = vld [vmem:[%s4 + $0x8] sm:$0xff]
    %v195 = vld [vmem:[%s4 + $0x10] sm:$0xff]
    %v196 = vld [vmem:[%s4 + $0x18] sm:$0xff]
    %198 = vset.pattern.permute.xlu0 0
    %199 = vperm.xlu0 %198, %v193
    %v200 = vpop.permute.xlu0 %199
    %203 = vset.pattern.permute.xlu0 0
    %204 = vperm.xlu0 %203, %v194
    %v205 = vpop.permute.xlu0 %204
    %208 = vset.pattern.permute.xlu0 0
    %209 = vperm.xlu0 %208, %v195
    %v210 = vpop.permute.xlu0 %209
    %213 = vset.pattern.permute.xlu0 0
    %214 = vperm.xlu0 %213, %v196
    %v215 = vpop.permute.xlu0 %214
    %v221 = vunpack.c.l.b16 %v187
    %v222 = vunpack.c.l.b16 %v188
    %v223 = vunpack.c.l.b16 %v189
    %v224 = vunpack.c.l.b16 %v190
    %v225 = vpack.c.b16 %v222, %v221
    %v226 = vpack.c.b16 %v224, %v223
    %vm227 = vcmask 261120
    %v229 = vsel %vm227, %v225, 0
    %v232 = vsel %vm227, %v226, 0
    %234 = vmatprep.subr.bf16.mxu0 0
    %235 = vmatpush1.bf16.msra.mxu0 0
    %236 = vmatprep.subr.bf16.mxu0 0
    %237 = vmatpush1.bf16.msra.mxu0 0
    %238 = vmatprep.subr.bf16.mxu0 0
    %239 = vmatpush1.bf16.msra.mxu0 0
    %240 = vmatprep.subr.bf16.mxu0 0
    %241 = vmatpush1.bf16.msra.mxu0 0
    %242 = vmatprep.subr.bf16.mxu0 0
    %243 = vmatpush1.bf16.msra.mxu0 0
    %244 = vmatprep.subr.bf16.mxu0 0
    %245 = vmatpush1.bf16.msra.mxu0 0
    %246 = vmatprep.subr.bf16.mxu0 0
    %247 = vmatpush1.bf16.msra.mxu0 %v192
    %248 = vmatprep.subr.bf16.mxu0 0
    %249 = vmatpush1.bf16.msra.mxu0 %v191
    %250 = vmatprep.subr.bf16.mxu0 0
    %251 = vmatpush2.bf16.msra.mxu0 0
    %252 = vmatprep.subr.bf16.mxu0 0
    %253 = vmatpush2.bf16.msra.mxu0 0
    %254 = vmatprep.subr.bf16.mxu0 0
    %255 = vmatpush2.bf16.msra.mxu0 0
    %256 = vmatprep.subr.bf16.mxu0 0
    %257 = vmatpush2.bf16.msra.mxu0 0
    %258 = vmatprep.subr.bf16.mxu0 0
    %259 = vmatpush2.bf16.msra.mxu0 0
    %260 = vmatprep.subr.bf16.mxu0 0
    %261 = vmatpush2.bf16.msra.mxu0 0
    %262 = vmatprep.subr.bf16.mxu0 0
    %263 = vmatpush2.bf16.msra.mxu0 0
    %264 = vmatprep.subr.bf16.mxu0 0
    %265 = vmatpush2.bf16.msra.mxu0 0
    %266 = vmatprep.mubr.bf16.mxu0 0
    %267 = vmatmul.mubr.bf16.gmra.mxu0 %v229
    %v268 = vpop.f32.mrf.mxu0
    %v269 = vadd.f32 %v200, %v268
    %v270 = vpop.f32.mrf.mxu0
    %v271 = vpop.f32.mrf.mxu0
    %v272 = vadd.f32 %v205, %v271
    %v273 = vpop.f32.mrf.mxu0
    %274 = vmatprep.mubr.bf16.mxu0 0
    %275 = vmatmul.mubr.bf16.gmra.mxu0 %v232
    %v276 = vpop.f32.mrf.mxu0
    %v277 = vadd.f32 %v210, %v276
    %v278 = vpop.f32.mrf.mxu0
    %v279 = vpop.f32.mrf.mxu0
    %v280 = vadd.f32 %v215, %v279
    %v281 = vpop.f32.mrf.mxu0
    %282 = vdwg.mxu0
    %v283 = vmax.f32 %v269, 0.0
    %v284 = vmax.f32 %v272, 0.0
    %v285 = vmax.f32 %v277, 0.0
    %v286 = vmax.f32 %v280, 0.0
    %v287 = vld [vmem:[%s5] sm:$0xff]
    %v288 = vld [vmem:[%s5 + $0x8] sm:$0xff]
    %v289 = vld [vmem:[%s5 + $0x10] sm:$0xff]
    %v290 = vld [vmem:[%s5 + $0x18] sm:$0xff]
    %292 = vset.pattern.permute.xlu0 0
    %293 = vperm.xlu0 %292, %v287
    %v294 = vpop.permute.xlu0 %293
    %297 = vset.pattern.permute.xlu0 0
    %298 = vperm.xlu0 %297, %v288
    %v299 = vpop.permute.xlu0 %298
    %302 = vset.pattern.permute.xlu0 0
    %303 = vperm.xlu0 %302, %v289
    %v304 = vpop.permute.xlu0 %303
    %307 = vset.pattern.permute.xlu0 0
    %308 = vperm.xlu0 %307, %v290
    %v309 = vpop.permute.xlu0 %308
    %v311 = vmul.f32 %v283, %v294
    %v312 = vmul.f32 %v284, %v299
    %v313 = vmul.f32 %v285, %v304
    %v314 = vmul.f32 %v286, %v309
    %v315 = vadd.f32 %v311, %v312
    %v316 = vadd.f32 %v315, %v313
    %v317 = vadd.f32 %v316, %v314
    %v318 = vrot.slane %v317, 4
    %v319 = vadd.f32 %v317, %v318
    %v320 = vrot.slane %v319, 2
    %v321 = vadd.f32 %v319, %v320
    %v322 = vrot.slane %v321, 1
    %v323 = vadd.f32 %v321, %v322
    %v324 = vld [vmem:[#allocation2] sm:$0x1]
    %326 = vset.pattern.permute.xlu0 0
    %327 = vperm.xlu0 %326, %v324
    %v328 = vpop.permute.xlu0 %327
    %v330 = vlaneseq
    %v331 = vshrl.u32 %v330, 7
    %v332 = vsub.s32 0, %v331
    %v333 = vrot.slane %v328, %v332
    %v334 = vadd.f32 %v323, %v333
    %335 = vst [vmem:[#allocation3] sm:$0x1] %v334
    // Predicated region
    $region30: #{tpu_custom_call.1} parent=1 // pred_check
      _
    $region31: #{tpu_custom_call.1} parent=1 // pred_check_branch
      %337 = sbr.rel (0) target = $region33
    $region32: #{tpu_custom_call.1} parent=1 // pred_region
      %s339 = ssub.s32 16, 16
      %340 = vsyncadd [#allocation4], %s339
      %s342 = sshll.u32 [#allocation3], 4
      %s343 = int_to_ptr.vmem [resolvable:$true] %s342
      %345 = dma.vmem_to_hbm [thread:$0]  %s343, 16, %s7, [#allocation4]
    $region33: #{tpu_custom_call.1} parent=1 // pred_fallthru
      _
    // Predicated region
    $region34: #{tpu_custom_call.1} parent=1 // pred_check
      _
    $region35: #{tpu_custom_call.1} parent=1 // pred_check_branch
      %347 = sbr.rel (0) target = $region37
    $region36: #{tpu_custom_call.1} parent=1 // pred_region
      %348 = dma.done [#allocation4], 16
    $region37: #{tpu_custom_call.1} parent=1 // pred_fallthru
      _
    %349 = vsyncpa [#allocation4], 1

</llo_original>
